<compile_context>
chip_gen: v7x
topology: tpu7x:2x2x1
jax: 0.10.0
libtpu: 0.0.40
codegen_flags: <defaults>
</compile_context>

<pallas_src>
import functools

import jax
import jax.numpy as jnp
from jax.experimental import pallas as pl
from jax.experimental.pallas import tpu as pltpu

# NF3 (threshold, level) pairs in ascending threshold order.  The sequential
# torch.where chain of round_n2f3 is equivalent to this bucketed select: the
# final value is the level of the highest threshold an element passes.
_NF3_NEG = (  # thresholds/levels scaled by scale_neg = |amin|
    (-0.7675113677978516, -0.5350227355957031),
    (-0.39097706973552704, -0.246931403875351),
    (-0.1234657019376755, 0.0),
)
_NF3_POS = (  # thresholds/levels scaled by scale_pos = |amax|
    (0.0916687622666359, 0.1833375245332718),
    (0.2826657369732857, 0.3819939494132996),
    (0.5024898052215576, 0.6229856610298157),
    (0.8114928305149078, 1.0),
)


def _n2f3_kernel(x_ref, o_ref):
    """One (tile_rows, G) block; each row is an independent quantization group."""
    qx = x_ref[...].astype(jnp.float32)

    # Per-group scales (amax/amin along the lane axis -> XLU reduce).
    scale_pos = jnp.abs(jnp.max(qx, axis=1, keepdims=True))  # (tile, 1)
    scale_neg = jnp.abs(jnp.min(qx, axis=1, keepdims=True))  # (tile, 1)

    # Unified ascending threshold chain with the scales folded into per-row
    # threshold / dequantized-level columns:
    #   qx / scale >= t   <=>   qx >= t * scale        (scale > 0)
    # so the per-element work is exactly 7 compares + 7 selects against
    # broadcast (tile, 1) columns.  Positive elements fail every scaled
    # positive threshold only if they belong in the 0 bucket (covered by the
    # -0.1234*scale_neg threshold they always pass); negative elements fail
    # every scaled positive threshold, so the buckets stay nested.
    #
    # NOTE(layout): a (tile, 1) f32 column still spans ceil(tile/8) vregs, so
    # the ~15 column ops below are not free; they replace the strictly more
    # expensive per-element divide/select/multiply path of the old version.
    #
    # Degenerate rows (scale == 0: a group whose max or min is exactly 0)
    # deviate from the PyTorch reference: torch propagates NaN (0/0) across
    # the row, this kernel produces the finite value 0 for those elements.
    out = jnp.broadcast_to(-scale_neg, qx.shape)  # bottom level: -1.0 * scale_neg
    for t, lvl in _NF3_NEG:
        val = lvl * scale_neg if lvl != 0.0 else 0.0
        out = jnp.where(qx >= t * scale_neg, val, out)
    for t, lvl in _NF3_POS:
        val = lvl * scale_pos if lvl != 1.0 else scale_pos
        out = jnp.where(qx >= t * scale_pos, val, out)

    o_ref[...] = out.astype(o_ref.dtype)


def _pick_tile_rows(rows, g, itemsize, block_bytes, min_blocks=4):
    """Row-tile sizing: byte-capped, sublane-rounded, never a 1-step grid."""
    # Sublane packing multiple: 8 for 4-byte, 16 for 2-byte, 32 for 1-byte dtypes.
    sublane = {4: 8, 2: 16, 1: 32}.get(itemsize, 8)
    # Byte cap per input block; double-buffered in+out => ~4x this in VMEM.
    cap = max(sublane, (block_bytes // max(1, g * itemsize)) // sublane * sublane)
    if rows <= sublane:
        return rows  # tiny problem: a single full-extent block is always legal
    # Target at least `min_blocks` grid steps so the pipeline double-buffers
    # and (on v7x) both TensorCores get work.
    target = pl.cdiv(rows, min_blocks)
    target = max(sublane, ((target + sublane - 1) // sublane) * sublane)
    tile = min(cap, target)
    if tile >= rows:
        return rows
    return tile


@functools.partial(jax.jit, static_argnames=("q_group_size", "block_bytes"))
def ste_n2f3_quantize(x, q_group_size=128, block_bytes=2 << 20):
    """JAX/Pallas equivalent of SteN2F3Quantizer(bit, q_group_size).forward(x)."""
    org_shape = x.shape
    if q_group_size > 0:
        assert org_shape[-1] % q_group_size == 0
        g = q_group_size
    elif q_group_size == -1:
        g = org_shape[-1]
    else:
        raise ValueError("q_group_size must be > 0 or == -1")
    # TODO(synk): for g < 128 the output block is lane-sparse (masked partial
    # stores); packing 128//g groups per 128-lane row would fix that path.
    # The default g=128 (and any multiple of 128) is lane-dense.

    qx = x.reshape(-1, g)
    rows = qx.shape[0]
    itemsize = jnp.dtype(x.dtype).itemsize
    tile_rows = _pick_tile_rows(rows, g, itemsize, block_bytes)
    # Partial last block (rows % tile_rows != 0) is safe: groups are row-wise
    # independent, padded input rows compute garbage that is masked out of the
    # output block by Pallas.  Keep rows independent if this kernel evolves.
    grid = (pl.cdiv(rows, tile_rows),)

    out = pl.pallas_call(
        _n2f3_kernel,
        out_shape=jax.ShapeDtypeStruct((rows, g), x.dtype),
        grid=grid,
        in_specs=[pl.BlockSpec((tile_rows, g), lambda i: (i, 0))],
        out_specs=pl.BlockSpec((tile_rows, g), lambda i: (i, 0)),
        compiler_params=pltpu.CompilerParams(
            dimension_semantics=("parallel",),
            vmem_limit_bytes=32 * 1024 * 1024),
    )(qx)

    return out.reshape(org_shape)


# TODO(synk): forward only; the round_pass straight-through-estimator gradient
# would need a jax.custom_vjp wrapper (identity grad through the rounding).


def _reference(x, q_group_size=128):
    """Pure-JAX reference mirroring the PyTorch forward (division-based)."""
    org_shape = x.shape
    g = q_group_size if q_group_size > 0 else org_shape[-1]
    qx = x.reshape(-1, g).astype(jnp.float32)
    max_val = jnp.max(qx, axis=1, keepdims=True)
    min_val = jnp.min(qx, axis=1, keepdims=True)
    scale_pos = jnp.abs(max_val)
    scale_neg = jnp.abs(min_val)
    x_pos = jnp.where(qx >= 0, qx, 0.0)
    x_neg = jnp.where(qx < 0, qx, 0.0)
    q_pos = x_pos / scale_pos
    q_neg = x_neg / scale_neg
    q_pos = jnp.where(q_pos >= 0.8114928305149078, 1.0, q_pos)
    q_pos = jnp.where((q_pos < 0.8114928305149078) & (q_pos >= 0.5024898052215576),
                      0.6229856610298157, q_pos)
    q_pos = jnp.where((q_pos < 0.5024898052215576) & (q_pos >= 0.2826657369732857),
                      0.3819939494132996, q_pos)
    q_pos = jnp.where((q_pos < 0.2826657369732857) & (q_pos >= 0.0916687622666359),
                      0.1833375245332718, q_pos)
    q_pos = jnp.where(q_pos < 0.0916687622666359, 0.0, q_pos)
    q_neg = jnp.where(q_neg >= -0.1234657019376755, 0.0, q_neg)
    q_neg = jnp.where((q_neg < -0.1234657019376755) & (q_neg >= -0.39097706973552704),
                      -0.246931403875351, q_neg)
    q_neg = jnp.where((q_neg < -0.39097706973552704) & (q_neg >= -0.7675113677978516),
                      -0.5350227355957031, q_neg)
    q_neg = jnp.where(q_neg < -0.7675113677978516, -1.0, q_neg)
    out = q_pos * scale_pos + q_neg * scale_neg
    return out.reshape(org_shape).astype(x.dtype)


def _assert_matches(y, y_ref, name, atol=1e-5, rtol=1e-5):
    # The kernel buckets via qx >= t*scale instead of qx/scale >= t (no
    # per-element divide).  The two only disagree for values within ~1 ulp of
    # a bucket edge, so allow a vanishing fraction of element mismatches while
    # still catching any real bug.
    bad = ~jnp.isclose(y.astype(jnp.float32), y_ref.astype(jnp.float32),
                       atol=atol, rtol=rtol)
    frac = float(jnp.mean(bad.astype(jnp.float32)))
    assert frac < 1e-3, (name, frac)


if __name__ == "__main__":
    key = jax.random.PRNGKey(0)
    k1, k2, k3, k4 = jax.random.split(key, 4)

    # Weight-like tensor, last dim a multiple of q_group_size=128.
    # rows=64 -> default tiling gives a 4-step pipelined grid.
    x = jax.random.normal(k1, (2, 4, 8, 128), dtype=jnp.float32)
    y = jax.block_until_ready(ste_n2f3_quantize(x, q_group_size=128))
    assert y.shape == x.shape and y.dtype == x.dtype
    _assert_matches(y, _reference(x, q_group_size=128), "f32_default")

    # Multi-block pipelined path with a partial, masked last row block
    # (68 groups, 16-row tiles -> grid of 5).
    x2 = jax.random.normal(k2, (68, 128), dtype=jnp.float32)
    y2 = jax.block_until_ready(
        ste_n2f3_quantize(x2, q_group_size=128, block_bytes=16 * 128 * 4))
    _assert_matches(y2, _reference(x2, q_group_size=128), "f32_partial")

    # bf16 smoke test (kernel computes in f32 internally, output cast back).
    x3 = jax.random.normal(k3, (4, 256), dtype=jnp.bfloat16)
    y3 = jax.block_until_ready(ste_n2f3_quantize(x3, q_group_size=128))
    assert y3.dtype == jnp.bfloat16
    _assert_matches(y3, _reference(x3, q_group_size=128), "bf16", atol=2e-2, rtol=2e-2)

    # q_group_size == -1 path (whole last dim is one group).
    x4 = jax.random.normal(k4, (8, 256), dtype=jnp.float32)
    y4 = jax.block_until_ready(ste_n2f3_quantize(x4, q_group_size=-1))
    _assert_matches(y4, _reference(x4, q_group_size=-1), "group_minus1")

    print("KERNEL_OK")
</pallas_src>

<mosaic_0001>
module attributes {stable_mosaic.version = 11 : i64} {
  func.func @_n2f3_kernel(%arg0: i32, %arg1: memref<16x128xf32, #tpu.memory_space<vmem>>, %arg2: memref<16x128xf32, #tpu.memory_space<vmem>>) attributes {dimension_semantics = [#tpu.dimension_semantics<parallel>], iteration_bounds = array<i64: 4>, scalar_prefetch = 0 : i64, scratch_operands = 0 : i64, tpu.core_type = #tpu.core_type<tc>, window_params = [{transform_indices = @transform_0, window_bounds = array<i64: 16, 128>}, {transform_indices = @transform_1, window_bounds = array<i64: 16, 128>}]} {
    %c0 = arith.constant 0 : index
    %c0_0 = arith.constant 0 : index
    %0 = vector.load %arg1[%c0, %c0_0] : memref<16x128xf32, #tpu.memory_space<vmem>>, vector<16x128xf32>
    %cst = arith.constant dense<0xFF800000> : vector<16xf32>
    %1 = vector.multi_reduction <maximumf>, %0, %cst [1] : vector<16x128xf32> to vector<16xf32>
    %2 = vector.shape_cast %1 : vector<16xf32> to vector<16x1xf32>
    %3 = math.absf %2 : vector<16x1xf32>
    %cst_1 = arith.constant dense<0x7F800000> : vector<16xf32>
    %4 = vector.multi_reduction <minimumf>, %0, %cst_1 [1] : vector<16x128xf32> to vector<16xf32>
    %5 = vector.shape_cast %4 : vector<16xf32> to vector<16x1xf32>
    %6 = math.absf %5 : vector<16x1xf32>
    %cst_2 = arith.constant 0.000000e+00 : f32
    %7 = vector.broadcast %cst_2 : f32 to vector<16x1xf32>
    %8 = arith.subf %7, %6 : vector<16x1xf32>
    %9 = vector.shape_cast %8 : vector<16x1xf32> to vector<16x1xf32>
    %10 = vector.broadcast %9 : vector<16x1xf32> to vector<16x128xf32>
    %cst_3 = arith.constant -0.535022736 : f32
    %11 = vector.broadcast %cst_3 : f32 to vector<16x1xf32>
    %12 = arith.mulf %11, %6 : vector<16x1xf32>
    %cst_4 = arith.constant -0.767511368 : f32
    %13 = vector.broadcast %cst_4 : f32 to vector<16x1xf32>
    %14 = arith.mulf %13, %6 : vector<16x1xf32>
    %15 = vector.broadcast %14 : vector<16x1xf32> to vector<16x128xf32>
    %16 = arith.cmpf oge, %0, %15 : vector<16x128xf32>
    %17 = vector.shape_cast %12 : vector<16x1xf32> to vector<16x1xf32>
    %18 = vector.broadcast %17 : vector<16x1xf32> to vector<16x128xf32>
    %19 = arith.select %16, %18, %10 : vector<16x128xi1>, vector<16x128xf32>
    %cst_5 = arith.constant -0.246931404 : f32
    %20 = vector.broadcast %cst_5 : f32 to vector<16x1xf32>
    %21 = arith.mulf %20, %6 : vector<16x1xf32>
    %cst_6 = arith.constant -0.390977085 : f32
    %22 = vector.broadcast %cst_6 : f32 to vector<16x1xf32>
    %23 = arith.mulf %22, %6 : vector<16x1xf32>
    %24 = vector.broadcast %23 : vector<16x1xf32> to vector<16x128xf32>
    %25 = arith.cmpf oge, %0, %24 : vector<16x128xf32>
    %26 = vector.shape_cast %21 : vector<16x1xf32> to vector<16x1xf32>
    %27 = vector.broadcast %26 : vector<16x1xf32> to vector<16x128xf32>
    %28 = arith.select %25, %27, %19 : vector<16x128xi1>, vector<16x128xf32>
    %cst_7 = arith.constant -0.123465702 : f32
    %29 = vector.broadcast %cst_7 : f32 to vector<16x1xf32>
    %30 = arith.mulf %29, %6 : vector<16x1xf32>
    %31 = vector.broadcast %30 : vector<16x1xf32> to vector<16x128xf32>
    %32 = arith.cmpf oge, %0, %31 : vector<16x128xf32>
    %cst_8 = arith.constant 0.000000e+00 : f32
    %33 = vector.broadcast %cst_8 : f32 to vector<16x128xf32>
    %34 = arith.select %32, %33, %28 : vector<16x128xi1>, vector<16x128xf32>
    %cst_9 = arith.constant 0.183337525 : f32
    %35 = vector.broadcast %cst_9 : f32 to vector<16x1xf32>
    %36 = arith.mulf %35, %3 : vector<16x1xf32>
    %cst_10 = arith.constant 0.0916687622 : f32
    %37 = vector.broadcast %cst_10 : f32 to vector<16x1xf32>
    %38 = arith.mulf %37, %3 : vector<16x1xf32>
    %39 = vector.broadcast %38 : vector<16x1xf32> to vector<16x128xf32>
    %40 = arith.cmpf oge, %0, %39 : vector<16x128xf32>
    %41 = vector.shape_cast %36 : vector<16x1xf32> to vector<16x1xf32>
    %42 = vector.broadcast %41 : vector<16x1xf32> to vector<16x128xf32>
    %43 = arith.select %40, %42, %34 : vector<16x128xi1>, vector<16x128xf32>
    %cst_11 = arith.constant 0.381993949 : f32
    %44 = vector.broadcast %cst_11 : f32 to vector<16x1xf32>
    %45 = arith.mulf %44, %3 : vector<16x1xf32>
    %cst_12 = arith.constant 0.28266573 : f32
    %46 = vector.broadcast %cst_12 : f32 to vector<16x1xf32>
    %47 = arith.mulf %46, %3 : vector<16x1xf32>
    %48 = vector.broadcast %47 : vector<16x1xf32> to vector<16x128xf32>
    %49 = arith.cmpf oge, %0, %48 : vector<16x128xf32>
    %50 = vector.shape_cast %45 : vector<16x1xf32> to vector<16x1xf32>
    %51 = vector.broadcast %50 : vector<16x1xf32> to vector<16x128xf32>
    %52 = arith.select %49, %51, %43 : vector<16x128xi1>, vector<16x128xf32>
    %cst_13 = arith.constant 0.622985661 : f32
    %53 = vector.broadcast %cst_13 : f32 to vector<16x1xf32>
    %54 = arith.mulf %53, %3 : vector<16x1xf32>
    %cst_14 = arith.constant 0.502489805 : f32
    %55 = vector.broadcast %cst_14 : f32 to vector<16x1xf32>
    %56 = arith.mulf %55, %3 : vector<16x1xf32>
    %57 = vector.broadcast %56 : vector<16x1xf32> to vector<16x128xf32>
    %58 = arith.cmpf oge, %0, %57 : vector<16x128xf32>
    %59 = vector.shape_cast %54 : vector<16x1xf32> to vector<16x1xf32>
    %60 = vector.broadcast %59 : vector<16x1xf32> to vector<16x128xf32>
    %61 = arith.select %58, %60, %52 : vector<16x128xi1>, vector<16x128xf32>
    %cst_15 = arith.constant 0.8114928 : f32
    %62 = vector.broadcast %cst_15 : f32 to vector<16x1xf32>
    %63 = arith.mulf %62, %3 : vector<16x1xf32>
    %64 = vector.broadcast %63 : vector<16x1xf32> to vector<16x128xf32>
    %65 = arith.cmpf oge, %0, %64 : vector<16x128xf32>
    %66 = vector.shape_cast %3 : vector<16x1xf32> to vector<16x1xf32>
    %67 = vector.broadcast %66 : vector<16x1xf32> to vector<16x128xf32>
    %68 = arith.select %65, %67, %61 : vector<16x128xi1>, vector<16x128xf32>
    %c0_16 = arith.constant 0 : index
    %c0_17 = arith.constant 0 : index
    %69 = vector.load %arg2[%c0_16, %c0_17] : memref<16x128xf32, #tpu.memory_space<vmem>>, vector<16x128xf32>
    tpu.vector_store %arg2[%c0_16, %c0_17], %68 {strides = array<i32>} : memref<16x128xf32, #tpu.memory_space<vmem>>, vector<16x128xf32>,
    return
  }
  func.func @transform_0(%arg0: i32) -> (i32, i32) {
    %c0_i32 = arith.constant 0 : i32
    %c0_i32_0 = arith.constant 0 : i32
    return %arg0, %c0_i32 : i32, i32
  }
  func.func @transform_1(%arg0: i32) -> (i32, i32) {
    %c0_i32 = arith.constant 0 : i32
    %c0_i32_0 = arith.constant 0 : i32
    return %arg0, %c0_i32 : i32, i32
  }
}

</mosaic_0001>

<llo_original>
// kernel: ste_n2f3_quantize.1
$region0: #{ste_n2f3_quantize.1}
  #allocation0 [shape = 'u32[]', space=smem, size = 0x4, offset = 0x4, fixed_abs, tag = 'smem constant byte address 0x4 - core index']
  #allocation1 [shape = 'u32[144,128]{1,0:T(1,128)}', space=vmem, size = 0x12000, scoped, tag = 'internal scratch']
  %s0 = inlined_call_operand.hbm [shape: f32[64,128], index: 0, kind: input, shape index: {}]
  %s1 = inlined_call_operand.hbm [shape: f32[64,128], index: 1, kind: output, shape index: {}]
  %s2 = sld [smem:[#allocation0]]
  $region41: #{ste_n2f3_quantize.1} parent=0
    _
  %s4 = ssub.s32 1, %s2
  %s5 = scalar_select 0, %s4, %s2
  $region1: #{ste_n2f3_quantize.1} parent=0
    #allocation2 [shape = 'u8[16384]{0}', space=vmem, size = 0x4000, scoped, tag = 'input window, operand 0']
    #allocation3 [shape = 's32[2]{0}', space=sflag, size = 0x8, scoped, tag = 'scoped memory for ste_n2f3_quantize.1']
    #allocation4 [shape = 's32[2]{0}', space=sflag, size = 0x8, scoped, tag = 'scoped memory for ste_n2f3_quantize.1']
    #allocation5 [shape = 'u8[16384]{0}', space=vmem, size = 0x4000, scoped, tag = 'output window, operand 0']
    %6 = vsyncpa [#allocation3], 0
    %s7 = scalar_lea.sflag [#allocation3], 1
    %8 = vsyncpa %s7, 0
    %9 = vsyncpa [#allocation4], 0
    %s10 = scalar_lea.sflag [#allocation4], 1
    %11 = vsyncpa %s10, 0
    loop: start=0, step=1, limit=6
    $region2: #{ste_n2f3_quantize.1} parent=1 // loop_pre_header
      _
    $region3: #{ste_n2f3_quantize.1} parent=1 // loop_header
      %s13 = sphi 0, %s17
      %p14 = scmp.ge.s32.totalorder %s13, 6
      %s23 = sphi 0, %s25
      %s26 = sphi 0, %s23
      %s27 = sphi 0, %s26
      %s43 = sphi 0, %s27
      %s49 = sphi 0, %s51
      %s52 = sphi 0, %s49
      %s53 = sphi 0, %s52
      %s69 = sphi 0, %s53
    $region4: #{ste_n2f3_quantize.1} parent=1 // loop_header_branch
      %16 = sbr.rel (%p14) target = $region8
    $region5: #{ste_n2f3_quantize.1} parent=1 // loop_body
      %s18 = ssub.s32 %s13, 1
      %s19 = ssub.s32 %s13, 2
      %s20 = sadd.s32 %s13, 1
      %s21 = ssub.s32 %s13, %s20
      %p22 = scmp.eq.s32.totalorder %s21, 0
      %s24 = sadd.s32 %s23, 1
      %s25 = scalar_select %p22, %s23, %s24
      %p28 = pneg %p22
      %p29 = scmp.eq.s32.totalorder %s13, 3
      %p30 = por %p28, %p29
      %p31 = scmp.ne.s32.totalorder %s23, %s26
      %p32 = scmp.eq.s32.totalorder %s13, 0
      %p33 = por %p31, %p32
      %p34 = scmp.ne.s32.totalorder %s23, %s26
      %p35 = scmp.eq.s32.totalorder %s18, 3
      %p36 = por %p34, %p35
      %p37 = scmp.ne.s32.totalorder %s26, %s27
      %p38 = scmp.eq.s32.totalorder %s18, 0
      %p39 = por %p37, %p38
      %p40 = scmp.ne.s32.totalorder %s26, %s27
      %p41 = scmp.eq.s32.totalorder %s19, 3
      %p42 = por %p40, %p41
      %p44 = scmp.ne.s32.totalorder %s27, %s43
      %p45 = scmp.eq.s32.totalorder %s19, 0
      %p46 = por %p44, %p45
      %s47 = ssub.s32 %s13, %s20
      %p48 = scmp.eq.s32.totalorder %s47, 0
      %s50 = sadd.s32 %s49, 1
      %s51 = scalar_select %p48, %s49, %s50
      %p54 = pneg %p48
      %p55 = scmp.eq.s32.totalorder %s13, 3
      %p56 = por %p54, %p55
      %p57 = scmp.ne.s32.totalorder %s49, %s52
      %p58 = scmp.eq.s32.totalorder %s13, 0
      %p59 = por %p57, %p58
      %p60 = scmp.ne.s32.totalorder %s49, %s52
      %p61 = scmp.eq.s32.totalorder %s18, 3
      %p62 = por %p60, %p61
      %p63 = scmp.ne.s32.totalorder %s52, %s53
      %p64 = scmp.eq.s32.totalorder %s18, 0
      %p65 = por %p63, %p64
      %p66 = scmp.ne.s32.totalorder %s52, %s53
      %p67 = scmp.eq.s32.totalorder %s19, 3
      %p68 = por %p66, %p67
      %p70 = scmp.ne.s32.totalorder %s53, %s69
      %p71 = scmp.eq.s32.totalorder %s19, 0
      %p72 = por %p70, %p71
      %p73 = scmp.le.s32.totalorder 1, %s13
      %p74 = scmp.lt.s32.totalorder %s13, 5
      %p75 = pnand %p73, %p74
      %p76 = pneg %p75
      // Predicated region
      $region9: #{ste_n2f3_quantize.1} parent=5 // pred_check
        _
      $region10: #{ste_n2f3_quantize.1} parent=5 // pred_check_branch
        %78 = sbr.rel (%p75) target = $region12
      $region11: #{ste_n2f3_quantize.1} parent=5 // pred_region
        %s79 = ssub.s32 %s13, 1
      $region12: #{ste_n2f3_quantize.1} parent=5 // pred_fallthru
        _
      %p80 = scmp.lt.s32.totalorder %s13, 4
      // Predicated region
      $region13: #{ste_n2f3_quantize.1} parent=5 // pred_check
        %p81 = pneg %p80
      $region14: #{ste_n2f3_quantize.1} parent=5 // pred_check_branch
        %83 = sbr.rel (%p81) target = $region16
      $region15: #{ste_n2f3_quantize.1} parent=5 // pred_region
        // Predicated region
        $region17: #{ste_n2f3_quantize.1} parent=15 // pred_check
          %p84 = pneg %p33
        $region18: #{ste_n2f3_quantize.1} parent=15 // pred_check_branch
          %86 = sbr.rel (%p84) target = $region20
        $region19: #{ste_n2f3_quantize.1} parent=15 // pred_region
          %s87 = sand.u32 %s23, 1
          %s88 = scalar_lea.sflag [#allocation3], %s87
          %s89 = sand.u32 %s23, 1
          %s90 = smul.addr %s89, 16
          %s91 = scalar_lea.vmem [#allocation2], %s90
          %s92 = smul.u32 2, %s13
          %s94 = ssub.s32 256, 256
          %95 = vsyncadd %s88, %s94
          %s96 = smul.addr %s92, 128
          %s97 = scalar_lea.hbm %s0, %s96
          %s98 = sshll.u32 %s91, 4
          %s99 = int_to_ptr.vmem [resolvable:$true] %s98
          %104 = dma.hbm_to_vmem [thread:$0]  %s97, 256, %s99, %s88, 128, 128, 8
        $region20: #{ste_n2f3_quantize.1} parent=15 // pred_fallthru
          _
      $region16: #{ste_n2f3_quantize.1} parent=5 // pred_fallthru
        _
      %p105 = scmp.le.s32.totalorder 1, %s13
      %p106 = scmp.lt.s32.totalorder %s13, 5
      %p107 = pnand %p105, %p106
      %p108 = pneg %p107
      // Predicated region
      $region21: #{ste_n2f3_quantize.1} parent=5 // pred_check
        _
      $region22: #{ste_n2f3_quantize.1} parent=5 // pred_check_branch
        %110 = sbr.rel (%p107) target = $region24
      $region23: #{ste_n2f3_quantize.1} parent=5 // pred_region
        %s111 = ssub.s32 %s13, 1
        %s112 = sand.u32 %s26, 1
        %s113 = scalar_lea.sflag [#allocation3], %s112
        %s114 = sand.u32 %s26, 1
        %s115 = smul.addr %s114, 16
        %s116 = scalar_lea.vmem [#allocation2], %s115
        // Predicated region
        $region25: #{ste_n2f3_quantize.1} parent=23 // pred_check
          %p117 = pneg %p39
        $region26: #{ste_n2f3_quantize.1} parent=23 // pred_check_branch
          %119 = sbr.rel (%p117) target = $region28
        $region27: #{ste_n2f3_quantize.1} parent=23 // pred_region
          %120 = dma.done %s113, 256
        $region28: #{ste_n2f3_quantize.1} parent=23 // pred_fallthru
          _
        %s121 = sand.u32 %s26, 1
        %s122 = scalar_lea.sflag [#allocation3], %s121
        %s123 = sand.u32 %s26, 1
        %s124 = smul.addr %s123, 16
        %s125 = scalar_lea.vmem [#allocation2], %s124
        %p126 = pneg %p39
        %p127 = pneg %p36
        %p128 = pneg %p65
        %p129 = pneg %p62
        %s130 = sand.u32 %s52, 1
        %s131 = scalar_lea.sflag [#allocation4], %s130
        %s132 = sand.u32 %s52, 1
        %s133 = smul.addr %s132, 16
        %s134 = scalar_lea.vmem [#allocation5], %s133
        %s135 = smul.u32 2, %s18
        %s136 = smul.u32 2, %s18
        %v137 = vld [vmem:[%s116] sm:$0xff]
        %v138 = vld [vmem:[%s116 + $0x8] sm:$0xff]
        %139 = vmax.xlane.f32.xlu0 %v137
        %v140 = vpop.xlane.xlu0 %139
        %141 = vmax.xlane.f32.xlu0 %v138
        %v142 = vpop.xlane.xlu0 %141
        %v143 = vand.u32 2147483647, %v140
        %v144 = vand.u32 2147483647, %v142
        %145 = vmin.xlane.f32.xlu0 %v137
        %v146 = vpop.xlane.xlu0 %145
        %147 = vmin.xlane.f32.xlu0 %v138
        %v148 = vpop.xlane.xlu0 %147
        %v149 = vand.u32 2147483647, %v146
        %v150 = vand.u32 2147483647, %v148
        %v151 = vsub.f32 0.0, %v149
        %v152 = vsub.f32 0.0, %v150
        %v153 = vmul.f32 %v149, -0.53502274
        %v154 = vmul.f32 %v150, -0.53502274
        %v155 = vmul.f32 %v149, -0.76751137
        %v156 = vmul.f32 %v150, -0.76751137
        %vm157 = vcmp.ge.f32.partialorder %v137, %v155
        %vm158 = vcmp.ge.f32.partialorder %v138, %v156
        %v159 = vsel %vm157, %v153, %v151
        %v160 = vsel %vm158, %v154, %v152
        %v161 = vmul.f32 %v149, -0.2469314
        %v162 = vmul.f32 %v150, -0.2469314
        %v163 = vmul.f32 %v149, -0.39097708
        %v164 = vmul.f32 %v150, -0.39097708
        %vm165 = vcmp.ge.f32.partialorder %v137, %v163
        %vm166 = vcmp.ge.f32.partialorder %v138, %v164
        %v167 = vsel %vm165, %v161, %v159
        %v168 = vsel %vm166, %v162, %v160
        %v169 = vmul.f32 %v149, -0.1234657
        %v170 = vmul.f32 %v150, -0.1234657
        %vm171 = vcmp.ge.f32.partialorder %v137, %v169
        %vm172 = vcmp.ge.f32.partialorder %v138, %v170
        %v173 = vsel %vm171, 0.0, %v167
        %v174 = vsel %vm172, 0.0, %v168
        %v175 = vmul.f32 %v143, 0.18333752
        %v176 = vmul.f32 %v144, 0.18333752
        %v177 = vmul.f32 %v143, 0.09166876
        %v178 = vmul.f32 %v144, 0.09166876
        %vm179 = vcmp.ge.f32.partialorder %v137, %v177
        %vm180 = vcmp.ge.f32.partialorder %v138, %v178
        %v181 = vsel %vm179, %v175, %v173
        %v182 = vsel %vm180, %v176, %v174
        %v183 = vmul.f32 %v143, 0.38199395
        %v184 = vmul.f32 %v144, 0.38199395
        %v185 = vmul.f32 %v143, 0.28266573
        %v186 = vmul.f32 %v144, 0.28266573
        %vm187 = vcmp.ge.f32.partialorder %v137, %v185
        %vm188 = vcmp.ge.f32.partialorder %v138, %v186
        %v189 = vsel %vm187, %v183, %v181
        %v190 = vsel %vm188, %v184, %v182
        %v191 = vmul.f32 %v143, 0.62298566
        %v192 = vmul.f32 %v144, 0.62298566
        %v193 = vmul.f32 %v143, 0.5024898
        %v194 = vmul.f32 %v144, 0.5024898
        %vm195 = vcmp.ge.f32.partialorder %v137, %v193
        %vm196 = vcmp.ge.f32.partialorder %v138, %v194
        %v197 = vsel %vm195, %v191, %v189
        %v198 = vsel %vm196, %v192, %v190
        %v199 = vmul.f32 %v143, 0.8114928
        %v200 = vmul.f32 %v144, 0.8114928
        %vm201 = vcmp.ge.f32.partialorder %v137, %v199
        %vm202 = vcmp.ge.f32.partialorder %v138, %v200
        %v203 = vsel %vm201, %v143, %v197
        %v204 = vsel %vm202, %v144, %v198
        %205 = vst [vmem:[%s134] sm:$0xff] %v203
        %206 = vst [vmem:[%s134 + $0x8] sm:$0xff] %v204
        %s207 = sand.u32 %s52, 1
        %s208 = scalar_lea.sflag [#allocation4], %s207
        %s209 = sand.u32 %s52, 1
        %s210 = smul.addr %s209, 16
        %s211 = scalar_lea.vmem [#allocation5], %s210
        // Predicated region
        $region29: #{ste_n2f3_quantize.1} parent=23 // pred_check
          %p212 = pneg %p62
        $region30: #{ste_n2f3_quantize.1} parent=23 // pred_check_branch
          %214 = sbr.rel (%p212) target = $region32
        $region31: #{ste_n2f3_quantize.1} parent=23 // pred_region
          %s215 = smul.u32 2, %s18
          %s217 = ssub.s32 256, 256
          %218 = vsyncadd %s208, %s217
          %s219 = smul.addr %s215, 128
          %s220 = scalar_lea.hbm %s1, %s219
          %s221 = sshll.u32 %s211, 4
          %s222 = int_to_ptr.vmem [resolvable:$true] %s221
          %227 = dma.vmem_to_hbm [thread:$0]  %s222, 256, %s220, %s208, 128, 128, 8
        $region32: #{ste_n2f3_quantize.1} parent=23 // pred_fallthru
          _
      $region24: #{ste_n2f3_quantize.1} parent=5 // pred_fallthru
        _
      %p228 = scmp.le.s32.totalorder 2, %s13
      // Predicated region
      $region33: #{ste_n2f3_quantize.1} parent=5 // pred_check
        %p229 = pneg %p228
      $region34: #{ste_n2f3_quantize.1} parent=5 // pred_check_branch
        %231 = sbr.rel (%p229) target = $region36
      $region35: #{ste_n2f3_quantize.1} parent=5 // pred_region
        %s232 = ssub.s32 %s13, 2
        // Predicated region
        $region37: #{ste_n2f3_quantize.1} parent=35 // pred_check
          %p233 = pneg %p68
        $region38: #{ste_n2f3_quantize.1} parent=35 // pred_check_branch
          %235 = sbr.rel (%p233) target = $region40
        $region39: #{ste_n2f3_quantize.1} parent=35 // pred_region
          %s236 = sand.u32 %s53, 1
          %s237 = scalar_lea.sflag [#allocation4], %s236
          %s238 = sand.u32 %s53, 1
          %s239 = smul.addr %s238, 16
          %s240 = scalar_lea.vmem [#allocation5], %s239
          %241 = dma.done %s237, 256
        $region40: #{ste_n2f3_quantize.1} parent=35 // pred_fallthru
          _
      $region36: #{ste_n2f3_quantize.1} parent=5 // pred_fallthru
        _
    $region6: #{ste_n2f3_quantize.1} parent=1 // loop_footer
      %s17 = sadd.s32 1, %s13
    $region7: #{ste_n2f3_quantize.1} parent=1 // loop_footer_branch
      %12 = sbr.rel target = $region3
    $region8: #{ste_n2f3_quantize.1} parent=1 // loop_exit
      _
    %242 = vsyncpa [#allocation3], 1
    %s243 = scalar_lea.sflag [#allocation3], 1
    %244 = vsyncpa %s243, 1
    %245 = vsyncpa [#allocation4], 1
    %s246 = scalar_lea.sflag [#allocation4], 1
    %247 = vsyncpa %s246, 1

</llo_original>
